<compile_context>
chip_gen: v6e
topology: v6e:2x2x1
jax: 0.10.0
libtpu: 0.0.40
codegen_flags: <defaults>
</compile_context>

<pallas_src>
import functools

import jax
import jax.numpy as jnp
from jax import lax
from jax.experimental import pallas as pl
from jax.experimental.pallas import tpu as pltpu

LANE = 128


def _pad_to(x, size, axis):
    pad = size - x.shape[axis]
    if pad <= 0:
        return x
    widths = [(0, 0)] * x.ndim
    widths[axis] = (0, pad)
    return jnp.pad(x, widths)


# ---------------------------------------------------------------------------
# Phases A & C: batched, lane-dense matmul + bias (single MXU-friendly call).
# ---------------------------------------------------------------------------
def matmul_bias_kernel(x_ref, w_ref, b_ref, o_ref):
    o_ref[...] = (jnp.dot(x_ref[...], w_ref[...],
                          preferred_element_type=jnp.float32) + b_ref[...])


def matmul_bias(x, w, b):
    n, k = x.shape
    _, m = w.shape
    full2 = lambda i: (0, 0)
    return pl.pallas_call(
        matmul_bias_kernel,
        out_shape=jax.ShapeDtypeStruct((n, m), jnp.float32),
        grid=(1,),
        in_specs=[pl.BlockSpec((n, k), full2),
                  pl.BlockSpec((k, m), full2),
                  pl.BlockSpec((1, m), full2)],
        out_specs=pl.BlockSpec((n, m), full2),
        compiler_params=pltpu.CompilerParams(
            dimension_semantics=("parallel",)),
    )(x, w, b)


# ---------------------------------------------------------------------------
# Phase B: serial GRU recurrence.  One kernel invocation; gi_all, W_hh and the
# whole h_all output live in VMEM.  Gate blocks are 128-lane aligned (Hp=128),
# so the [0:Hp], [Hp:2Hp], [2Hp:3Hp] slices are tile-aligned (no copies).
# r/z biases of b_hh are pre-folded into gi_all; only the n-gate b_hh stays
# separate to preserve n = tanh(gi_n + r * (gh_n + b_hh_n)).
# ---------------------------------------------------------------------------
def gru_recurrence_kernel(gi_ref, h0_ref, whh_ref, bhn_ref, hall_ref,
                          *, seq_len, hp):
    def step(t, h_prev):
        gi = gi_ref[t]                                        # (B, 3*Hp)
        gh = jnp.dot(h_prev, whh_ref[...],
                     preferred_element_type=jnp.float32)      # (B, 3*Hp)
        r = jax.nn.sigmoid(gi[:, 0:hp] + gh[:, 0:hp])
        z = jax.nn.sigmoid(gi[:, hp:2 * hp] + gh[:, hp:2 * hp])
        n = jnp.tanh(gi[:, 2 * hp:3 * hp]
                     + r * (gh[:, 2 * hp:3 * hp] + bhn_ref[...]))
        h_new = (1.0 - z) * n + z * h_prev
        hall_ref[t] = h_new                                   # (B, Hp)
        return h_new

    # Keep elementwise gate math in f32 (safe on v5e; EUP handles sigmoid/tanh).
    lax.fori_loop(0, seq_len, step, h0_ref[...], unroll=True)


# ---------------------------------------------------------------------------
# Wrapper: embedding lookup + 3-phase pipeline, PyTorch-compatible outputs.
# ---------------------------------------------------------------------------
def char_rnn_forward(tokens, params, h0=None):
    """tokens: (B, T) int32. Returns (logits (B,T,V), h (1,B,H))."""
    emb_table = params["emb"]          # (V, E)
    wih = params["wih"]                # (E, 3H)
    whh = params["whh"]                # (H, 3H)
    bih = params["bih"]                # (1, 3H)
    bhh = params["bhh"]                # (1, 3H)
    wo = params["wo"]                  # (H, V)
    bo = params["bo"]                  # (1, V)

    B, T = tokens.shape
    V, E = emb_table.shape
    H = whh.shape[0]
    Hp = ((H + LANE - 1) // LANE) * LANE      # 32 -> 128
    Vp = ((V + LANE - 1) // LANE) * LANE      # 30 -> 128

    # --- padded, gate-aligned weights (each gate block starts at k*128 lanes)
    def pad_gates(w):                  # (rows, 3H) -> (rows, 3*Hp)
        return jnp.concatenate(
            [_pad_to(w[:, g * H:(g + 1) * H], Hp, axis=1) for g in range(3)],
            axis=1)

    wih_p = pad_gates(wih)                                    # (E, 3Hp)
    whh_p = _pad_to(pad_gates(whh), Hp, axis=0)               # (Hp, 3Hp)
    bias_a = pad_gates(jnp.concatenate(                       # (1, 3Hp)
        [bih[:, :2 * H] + bhh[:, :2 * H], bih[:, 2 * H:]], axis=1))
    bhn_p = _pad_to(bhh[:, 2 * H:], Hp, axis=1)               # (1, Hp)
    wo_p = _pad_to(_pad_to(wo, Hp, axis=0), Vp, axis=1)       # (Hp, Vp)
    bo_p = _pad_to(bo, Vp, axis=1)                            # (1, Vp)

    # --- embedding lookup (data-dependent gather, kept in XLA)
    # TODO(synk): could fuse the gather via scalar-prefetched token ids, but at
    # these sizes jnp.take is negligible.
    x_emb = jnp.take(emb_table, tokens, axis=0)               # (B, T, E)
    x_tm = jnp.transpose(x_emb, (1, 0, 2)).reshape(T * B, E)  # time-major rows

    # --- phase A: one batched input projection for all T steps
    gi_all = matmul_bias(x_tm, wih_p, bias_a).reshape(T, B, 3 * Hp)

    # --- initial hidden, zero-padded to Hp lanes
    if h0 is None:
        h0_p = jnp.zeros((B, Hp), jnp.float32)
    else:
        h0_p = _pad_to(h0.reshape(B, H).astype(jnp.float32), Hp, axis=1)

    # --- phase B: the serial recurrence (single invocation, grid collapsed)
    h_all = pl.pallas_call(
        functools.partial(gru_recurrence_kernel, seq_len=T, hp=Hp),
        out_shape=jax.ShapeDtypeStruct((T, B, Hp), jnp.float32),
        grid=(1,),
        in_specs=[pl.BlockSpec((T, B, 3 * Hp), lambda i: (0, 0, 0)),  # gi_all
                  pl.BlockSpec((B, Hp), lambda i: (0, 0)),            # h0
                  pl.BlockSpec((Hp, 3 * Hp), lambda i: (0, 0)),       # W_hh^T
                  pl.BlockSpec((1, Hp), lambda i: (0, 0))],           # b_hh_n
        out_specs=pl.BlockSpec((T, B, Hp), lambda i: (0, 0, 0)),      # h_all
        compiler_params=pltpu.CompilerParams(
            dimension_semantics=("arbitrary",)),   # recurrence must stay serial
    )(gi_all, h0_p, whh_p, bhn_p)

    # --- phase C: one batched output projection for all T steps
    logits_p = matmul_bias(h_all.reshape(T * B, Hp), wo_p, bo_p)      # (T*B, Vp)
    logits = jnp.transpose(logits_p.reshape(T, B, Vp)[:, :, :V], (1, 0, 2))
    h_final = h_all[T - 1, :, :H]
    return logits, h_final[None, :, :]             # logits (B,T,V), h (1,B,H)


# ---------------------------------------------------------------------------
# Params + pure-JAX reference (PyTorch GRU semantics) for the sanity check.
# ---------------------------------------------------------------------------
def init_params(key, vocab_size, emb=16, hidden=32):
    ks = jax.random.split(key, 7)
    scale = 0.1
    emb_table = scale * jax.random.normal(ks[0], (vocab_size, emb), jnp.float32)
    emb_table = emb_table.at[0].set(0.0)            # padding_idx=0
    wih = scale * jax.random.normal(ks[1], (emb, 3 * hidden), jnp.float32)
    whh = scale * jax.random.normal(ks[2], (hidden, 3 * hidden), jnp.float32)
    bih = scale * jax.random.normal(ks[3], (1, 3 * hidden), jnp.float32)
    bhh = scale * jax.random.normal(ks[4], (1, 3 * hidden), jnp.float32)
    wo = scale * jax.random.normal(ks[5], (hidden, vocab_size), jnp.float32)
    bo = scale * jax.random.normal(ks[6], (1, vocab_size), jnp.float32)
    return dict(emb=emb_table, wih=wih, whh=whh, bih=bih, bhh=bhh, wo=wo, bo=bo)


def reference_forward(tokens, params, h0=None):
    B, T = tokens.shape
    H = params["whh"].shape[0]
    x = jnp.take(params["emb"], tokens, axis=0)     # (B, T, E)
    h = jnp.zeros((B, H), jnp.float32) if h0 is None else h0.reshape(B, H)

    def step(h, x_t):
        gi = x_t @ params["wih"] + params["bih"]
        gh = h @ params["whh"] + params["bhh"]
        r = jax.nn.sigmoid(gi[:, :H] + gh[:, :H])
        z = jax.nn.sigmoid(gi[:, H:2 * H] + gh[:, H:2 * H])
        n = jnp.tanh(gi[:, 2 * H:] + r * gh[:, 2 * H:])
        h_new = (1.0 - z) * n + z * h
        return h_new, h_new

    h_final, hs = jax.lax.scan(step, h, jnp.transpose(x, (1, 0, 2)))
    out = jnp.transpose(hs, (1, 0, 2))              # (B, T, H)
    logits = out @ params["wo"] + params["bo"]
    return logits, h_final[None, :, :]


if __name__ == "__main__":
    vocab_size, emb, hidden = 30, 16, 32
    B, T = 2, 8

    key = jax.random.PRNGKey(0)
    pkey, tkey = jax.random.split(key)
    params = init_params(pkey, vocab_size, emb, hidden)
    tokens = jax.random.randint(tkey, (B, T), 0, vocab_size, dtype=jnp.int32)

    logits, h = char_rnn_forward(tokens, params)
    jax.block_until_ready((logits, h))

    ref_logits, ref_h = reference_forward(tokens, params)
    assert logits.shape == (B, T, vocab_size) and h.shape == (1, B, hidden)
    assert jnp.allclose(logits, ref_logits, atol=1e-5, rtol=1e-5)
    assert jnp.allclose(h, ref_h, atol=1e-5, rtol=1e-5)

    print("KERNEL_OK")
</pallas_src>

<mosaic_0001>
module attributes {stable_mosaic.version = 11 : i64} {
  func.func @matmul_bias_kernel(%arg0: i32, %arg1: memref<16x16xf32, #tpu.memory_space<vmem>>, %arg2: memref<16x384xf32, #tpu.memory_space<vmem>>, %arg3: memref<1x384xf32, #tpu.memory_space<vmem>>, %arg4: memref<16x384xf32, #tpu.memory_space<vmem>>) attributes {dimension_semantics = [#tpu.dimension_semantics<parallel>], iteration_bounds = array<i64: 1>, scalar_prefetch = 0 : i64, scratch_operands = 0 : i64, tpu.core_type = #tpu.core_type<tc>, window_params = [{pipeline_mode = #tpu.pipeline_mode<synchronous>, transform_indices = @transform_0, window_bounds = array<i64: 16, 16>}, {pipeline_mode = #tpu.pipeline_mode<synchronous>, transform_indices = @transform_1, window_bounds = array<i64: 16, 384>}, {pipeline_mode = #tpu.pipeline_mode<synchronous>, transform_indices = @transform_2, window_bounds = array<i64: 1, 384>}, {pipeline_mode = #tpu.pipeline_mode<synchronous>, transform_indices = @transform_3, window_bounds = array<i64: 16, 384>}]} {
    %c0 = arith.constant 0 : index
    %c0_0 = arith.constant 0 : index
    %0 = vector.load %arg1[%c0, %c0_0] : memref<16x16xf32, #tpu.memory_space<vmem>>, vector<16x16xf32>
    %c0_1 = arith.constant 0 : index
    %c0_2 = arith.constant 0 : index
    %1 = vector.load %arg2[%c0_1, %c0_2] : memref<16x384xf32, #tpu.memory_space<vmem>>, vector<16x384xf32>
    %cst = arith.constant dense<0.000000e+00> : vector<16x384xf32>
    %2 = tpu.matmul %0, %1, %cst {dimension_numbers = #tpu.dot_dimension_numbers<[1], [0], [0], [1], [0, 0, 1, 1], [], []>} : vector<16x16xf32>, vector<16x384xf32>, vector<16x384xf32> -> vector<16x384xf32>
    %c0_3 = arith.constant 0 : index
    %c0_4 = arith.constant 0 : index
    %3 = vector.load %arg3[%c0_3, %c0_4] : memref<1x384xf32, #tpu.memory_space<vmem>>, vector<1x384xf32>
    %4 = vector.broadcast %3 : vector<1x384xf32> to vector<16x384xf32>
    %5 = arith.addf %2, %4 : vector<16x384xf32>
    %c0_5 = arith.constant 0 : index
    %c0_6 = arith.constant 0 : index
    %6 = vector.load %arg4[%c0_5, %c0_6] : memref<16x384xf32, #tpu.memory_space<vmem>>, vector<16x384xf32>
    tpu.vector_store %arg4[%c0_5, %c0_6], %5 {strides = array<i32>} : memref<16x384xf32, #tpu.memory_space<vmem>>, vector<16x384xf32>,
    return
  }
  func.func @transform_0(%arg0: i32) -> (i32, i32) {
    %c0_i32 = arith.constant 0 : i32
    %c0_i32_0 = arith.constant 0 : i32
    %c0_i32_1 = arith.constant 0 : i32
    return %c0_i32, %c0_i32_0 : i32, i32
  }
  func.func @transform_1(%arg0: i32) -> (i32, i32) {
    %c0_i32 = arith.constant 0 : i32
    %c0_i32_0 = arith.constant 0 : i32
    %c0_i32_1 = arith.constant 0 : i32
    return %c0_i32, %c0_i32_0 : i32, i32
  }
  func.func @transform_2(%arg0: i32) -> (i32, i32) {
    %c0_i32 = arith.constant 0 : i32
    %c0_i32_0 = arith.constant 0 : i32
    %c0_i32_1 = arith.constant 0 : i32
    return %c0_i32, %c0_i32_0 : i32, i32
  }
  func.func @transform_3(%arg0: i32) -> (i32, i32) {
    %c0_i32 = arith.constant 0 : i32
    %c0_i32_0 = arith.constant 0 : i32
    %c0_i32_1 = arith.constant 0 : i32
    return %c0_i32, %c0_i32_0 : i32, i32
  }
}

</mosaic_0001>

<llo_original>
// kernel: tpu_custom_call.1
$region0: #{tpu_custom_call.1}
  #allocation0 [shape = 'u32[]', space=smem, size = 0x4, offset = 0x4, fixed_abs, tag = 'smem constant byte address 0x4 - core index']
  #allocation1 [shape = 'u32[144,128]{1,0:T(1,128)}', space=vmem, size = 0x12000, scoped, tag = 'internal scratch']
  %s0 = inlined_call_operand.hbm [shape: f32[16,16], index: 0, kind: input, shape index: {}]
  %s1 = inlined_call_operand.hbm [shape: f32[16,384], index: 1, kind: input, shape index: {}]
  %s2 = inlined_call_operand.vmem [shape: f32[1,384], index: 2, kind: input, shape index: {}]
  %s3 = inlined_call_operand.hbm [shape: f32[16,384], index: 3, kind: output, shape index: {}]
  %s4 = sld [smem:[#allocation0]]
  $region30: #{tpu_custom_call.1} parent=0
    _
  %s6 = ssub.s32 1, %s4
  %s7 = scalar_select 0, %s6, %s4
  $region1: #{tpu_custom_call.1} parent=0
    #allocation2 [shape = 'u8[8192]{0}', space=vmem, size = 0x2000, scoped, tag = 'input window, operand 0, single buffered']
    #allocation3 [shape = 's32[1]{0}', space=sflag, size = 0x4, scoped, tag = 'scoped memory for tpu_custom_call.1']
    #allocation4 [shape = 's32[1]{0}', space=sflag, size = 0x4, scoped, tag = 'scoped memory for tpu_custom_call.1']
    #allocation5 [shape = 'u8[24576]{0}', space=vmem, size = 0x6000, scoped, tag = 'input window, operand 1, single buffered']
    #allocation6 [shape = 's32[1]{0}', space=sflag, size = 0x4, scoped, tag = 'scoped memory for tpu_custom_call.1']
    #allocation7 [shape = 'u8[24576]{0}', space=vmem, size = 0x6000, scoped, tag = 'output window, operand 0, single buffered']
    %8 = vsyncpa [#allocation3], 0
    %9 = vsyncpa [#allocation6], 0
    %10 = vsyncpa [#allocation4], 0
    // Predicated region
    $region2: #{tpu_custom_call.1} parent=1 // pred_check
      _
    $region3: #{tpu_custom_call.1} parent=1 // pred_check_branch
      %12 = sbr.rel (0) target = $region5
    $region4: #{tpu_custom_call.1} parent=1 // pred_region
      %s14 = ssub.s32 256, 256
      %15 = vsyncadd [#allocation3], %s14
      %s16 = sshll.u32 [#allocation2], 4
      %s17 = int_to_ptr.vmem [resolvable:$true] %s16
      %22 = dma.hbm_to_vmem [thread:$0]  %s0, 256, %s17, [#allocation3], 128, 128, 8
    $region5: #{tpu_custom_call.1} parent=1 // pred_fallthru
      _
    // Predicated region
    $region6: #{tpu_custom_call.1} parent=1 // pred_check
      _
    $region7: #{tpu_custom_call.1} parent=1 // pred_check_branch
      %24 = sbr.rel (0) target = $region9
    $region8: #{tpu_custom_call.1} parent=1 // pred_region
      %s26 = ssub.s32 768, 768
      %27 = vsyncadd [#allocation6], %s26
      %s28 = sshll.u32 [#allocation5], 4
      %s29 = int_to_ptr.vmem [resolvable:$true] %s28
      %34 = dma.hbm_to_vmem [thread:$0]  %s1, 768, %s29, [#allocation6], 384, 384, 24
    $region9: #{tpu_custom_call.1} parent=1 // pred_fallthru
      _
    // Predicated region
    $region10: #{tpu_custom_call.1} parent=1 // pred_check
      _
    $region11: #{tpu_custom_call.1} parent=1 // pred_check_branch
      %36 = sbr.rel (0) target = $region13
    $region12: #{tpu_custom_call.1} parent=1 // pred_region
      _
    $region13: #{tpu_custom_call.1} parent=1 // pred_fallthru
      _
    // Predicated region
    $region14: #{tpu_custom_call.1} parent=1 // pred_check
      _
    $region15: #{tpu_custom_call.1} parent=1 // pred_check_branch
      %38 = sbr.rel (0) target = $region17
    $region16: #{tpu_custom_call.1} parent=1 // pred_region
      %39 = dma.done [#allocation3], 256
    $region17: #{tpu_custom_call.1} parent=1 // pred_fallthru
      _
    // Predicated region
    $region18: #{tpu_custom_call.1} parent=1 // pred_check
      _
    $region19: #{tpu_custom_call.1} parent=1 // pred_check_branch
      %41 = sbr.rel (0) target = $region21
    $region20: #{tpu_custom_call.1} parent=1 // pred_region
      %42 = dma.done [#allocation6], 768
    $region21: #{tpu_custom_call.1} parent=1 // pred_fallthru
      _
    %v43 = vld [vmem:[#allocation2] sm:$0xff]
    %v44 = vld [vmem:[#allocation2 + $0x8] sm:$0xff]
    %v45 = vld [vmem:[#allocation5] sm:$0xff]
    %v46 = vld [vmem:[#allocation5 + $0x8] sm:$0xff]
    %v47 = vld [vmem:[#allocation5 + $0x10] sm:$0xff]
    %v48 = vld [vmem:[#allocation5 + $0x18] sm:$0xff]
    %v49 = vld [vmem:[#allocation5 + $0x20] sm:$0xff]
    %v50 = vld [vmem:[#allocation5 + $0x28] sm:$0xff]
    %v51 = vld [vmem:[%s2] sm:$0x7]
    %v53 = vlaneseq
    %v54 = vshrl.u32 %v53, 7
    %v55 = vsub.s32 0, %v54
    %v56 = vrot.slane %v51, %v55
    %v57 = vlaneseq
    %v58 = vshrl.u32 %v57, 7
    %v59 = vsub.s32 1, %v58
    %v60 = vrot.slane %v51, %v59
    %v61 = vlaneseq
    %v62 = vshrl.u32 %v61, 7
    %v63 = vsub.s32 2, %v62
    %v64 = vrot.slane %v51, %v63
    %vm68 = vcmask 130048
    %v70 = vsel %vm68, %v43, 0
    %v73 = vsel %vm68, %v44, 0
    %75 = vmatprep.subr.mxu0 0.0
    %76 = vmatpush1.msra.mxu0 0.0
    %77 = vmatprep.subr.mxu0 0.0
    %78 = vmatpush1.msra.mxu0 0.0
    %79 = vmatprep.subr.mxu0 0.0
    %80 = vmatpush1.msra.mxu0 0.0
    %81 = vmatprep.subr.mxu0 0.0
    %82 = vmatpush1.msra.mxu0 0.0
    %83 = vmatprep.subr.mxu0 0.0
    %84 = vmatpush1.msra.mxu0 0.0
    %85 = vmatprep.subr.mxu0 0.0
    %86 = vmatpush1.msra.mxu0 0.0
    %87 = vmatprep.subr.mxu0 0.0
    %88 = vmatpush1.msra.mxu0 0.0
    %89 = vmatprep.subr.mxu0 0.0
    %90 = vmatpush1.msra.mxu0 0.0
    %91 = vmatprep.subr.mxu0 0.0
    %92 = vmatpush1.msra.mxu0 0.0
    %93 = vmatprep.subr.mxu0 0.0
    %94 = vmatpush1.msra.mxu0 0.0
    %95 = vmatprep.subr.mxu0 0.0
    %96 = vmatpush1.msra.mxu0 0.0
    %97 = vmatprep.subr.mxu0 0.0
    %98 = vmatpush1.msra.mxu0 0.0
    %99 = vmatprep.subr.mxu0 0.0
    %100 = vmatpush1.msra.mxu0 0.0
    %101 = vmatprep.subr.mxu0 0.0
    %102 = vmatpush1.msra.mxu0 0.0
    %103 = vmatprep.subr.mxu0 %v49
    %104 = vmatpush1.msra.mxu0 %v48
    %105 = vmatprep.subr.mxu0 %v46
    %106 = vmatpush1.msra.mxu0 %v45
    %107 = vmatprep.subr.mxu0 0.0
    %108 = vmatpush2.msra.mxu0 0.0
    %109 = vmatprep.subr.mxu0 0.0
    %110 = vmatpush2.msra.mxu0 0.0
    %111 = vmatprep.subr.mxu0 0.0
    %112 = vmatpush2.msra.mxu0 0.0
    %113 = vmatprep.subr.mxu0 0.0
    %114 = vmatpush2.msra.mxu0 0.0
    %115 = vmatprep.subr.mxu0 0.0
    %116 = vmatpush2.msra.mxu0 0.0
    %117 = vmatprep.subr.mxu0 0.0
    %118 = vmatpush2.msra.mxu0 0.0
    %119 = vmatprep.subr.mxu0 0.0
    %120 = vmatpush2.msra.mxu0 0.0
    %121 = vmatprep.subr.mxu0 0.0
    %122 = vmatpush2.msra.mxu0 0.0
    %123 = vmatprep.subr.mxu0 0.0
    %124 = vmatpush2.msra.mxu0 0.0
    %125 = vmatprep.subr.mxu0 0.0
    %126 = vmatpush2.msra.mxu0 0.0
    %127 = vmatprep.subr.mxu0 0.0
    %128 = vmatpush2.msra.mxu0 0.0
    %129 = vmatprep.subr.mxu0 0.0
    %130 = vmatpush2.msra.mxu0 0.0
    %131 = vmatprep.subr.mxu0 0.0
    %132 = vmatpush2.msra.mxu0 0.0
    %133 = vmatprep.subr.mxu0 0.0
    %134 = vmatpush2.msra.mxu0 0.0
    %135 = vmatprep.subr.mxu0 0.0
    %136 = vmatpush2.msra.mxu0 0.0
    %137 = vmatprep.subr.mxu0 0.0
    %138 = vmatpush2.msra.mxu0 0.0
    %139 = vmatprep.mubr.f32.mxu0 0.0
    %140 = vmatmul.mubr.f32.gmra.mxu0 %v70
    %v141 = vpop.f32.mrf.mxu0
    %v142 = vadd.f32 %v56, %v141
    %v143 = vpop.f32.mrf.mxu0
    %v144 = vadd.f32 %v60, %v143
    %145 = vmatprep.mubr.f32.mxu0 0.0
    %146 = vmatmul.mubr.f32.gmra.mxu0 %v73
    %v147 = vpop.f32.mrf.mxu0
    %v148 = vadd.f32 %v56, %v147
    %v149 = vpop.f32.mrf.mxu0
    %v150 = vadd.f32 %v60, %v149
    %151 = vdwg.mxu0
    %152 = vmatprep.subr.mxu0 0.0
    %153 = vmatpush1.msra.mxu0 0.0
    %154 = vmatprep.subr.mxu0 0.0
    %155 = vmatpush1.msra.mxu0 0.0
    %156 = vmatprep.subr.mxu0 0.0
    %157 = vmatpush1.msra.mxu0 0.0
    %158 = vmatprep.subr.mxu0 0.0
    %159 = vmatpush1.msra.mxu0 0.0
    %160 = vmatprep.subr.mxu0 0.0
    %161 = vmatpush1.msra.mxu0 0.0
    %162 = vmatprep.subr.mxu0 0.0
    %163 = vmatpush1.msra.mxu0 0.0
    %164 = vmatprep.subr.mxu0 0.0
    %165 = vmatpush1.msra.mxu0 0.0
    %166 = vmatprep.subr.mxu0 0.0
    %167 = vmatpush1.msra.mxu0 0.0
    %168 = vmatprep.subr.mxu0 0.0
    %169 = vmatpush1.msra.mxu0 0.0
    %170 = vmatprep.subr.mxu0 0.0
    %171 = vmatpush1.msra.mxu0 0.0
    %172 = vmatprep.subr.mxu0 0.0
    %173 = vmatpush1.msra.mxu0 0.0
    %174 = vmatprep.subr.mxu0 0.0
    %175 = vmatpush1.msra.mxu0 0.0
    %176 = vmatprep.subr.mxu0 0.0
    %177 = vmatpush1.msra.mxu0 0.0
    %178 = vmatprep.subr.mxu0 0.0
    %179 = vmatpush1.msra.mxu0 0.0
    %180 = vmatprep.subr.mxu0 0.0
    %181 = vmatpush1.msra.mxu0 %v50
    %182 = vmatprep.subr.mxu0 0.0
    %183 = vmatpush1.msra.mxu0 %v47
    %184 = vmatprep.subr.mxu0 0.0
    %185 = vmatpush2.msra.mxu0 0.0
    %186 = vmatprep.subr.mxu0 0.0
    %187 = vmatpush2.msra.mxu0 0.0
    %188 = vmatprep.subr.mxu0 0.0
    %189 = vmatpush2.msra.mxu0 0.0
    %190 = vmatprep.subr.mxu0 0.0
    %191 = vmatpush2.msra.mxu0 0.0
    %192 = vmatprep.subr.mxu0 0.0
    %193 = vmatpush2.msra.mxu0 0.0
    %194 = vmatprep.subr.mxu0 0.0
    %195 = vmatpush2.msra.mxu0 0.0
    %196 = vmatprep.subr.mxu0 0.0
    %197 = vmatpush2.msra.mxu0 0.0
    %198 = vmatprep.subr.mxu0 0.0
    %199 = vmatpush2.msra.mxu0 0.0
    %200 = vmatprep.subr.mxu0 0.0
    %201 = vmatpush2.msra.mxu0 0.0
    %202 = vmatprep.subr.mxu0 0.0
    %203 = vmatpush2.msra.mxu0 0.0
    %204 = vmatprep.subr.mxu0 0.0
    %205 = vmatpush2.msra.mxu0 0.0
    %206 = vmatprep.subr.mxu0 0.0
    %207 = vmatpush2.msra.mxu0 0.0
    %208 = vmatprep.subr.mxu0 0.0
    %209 = vmatpush2.msra.mxu0 0.0
    %210 = vmatprep.subr.mxu0 0.0
    %211 = vmatpush2.msra.mxu0 0.0
    %212 = vmatprep.subr.mxu0 0.0
    %213 = vmatpush2.msra.mxu0 0.0
    %214 = vmatprep.subr.mxu0 0.0
    %215 = vmatpush2.msra.mxu0 0.0
    %216 = vmatprep.mubr.f32.mxu0 0.0
    %217 = vmatmul.mubr.f32.gmra.mxu0 %v70
    %v218 = vpop.f32.mrf.mxu0
    %v219 = vadd.f32 %v64, %v218
    %v220 = vpop.f32.mrf.mxu0
    %221 = vmatprep.mubr.f32.mxu0 0.0
    %222 = vmatmul.mubr.f32.gmra.mxu0 %v73
    %v223 = vpop.f32.mrf.mxu0
    %v224 = vadd.f32 %v64, %v223
    %v225 = vpop.f32.mrf.mxu0
    %226 = vdwg.mxu0
    %227 = vst [vmem:[#allocation7] sm:$0xff] %v142
    %228 = vst [vmem:[#allocation7 + $0x8] sm:$0xff] %v144
    %229 = vst [vmem:[#allocation7 + $0x10] sm:$0xff] %v219
    %230 = vst [vmem:[#allocation7 + $0x18] sm:$0xff] %v148
    %231 = vst [vmem:[#allocation7 + $0x20] sm:$0xff] %v150
    %232 = vst [vmem:[#allocation7 + $0x28] sm:$0xff] %v224
    // Predicated region
    $region22: #{tpu_custom_call.1} parent=1 // pred_check
      _
    $region23: #{tpu_custom_call.1} parent=1 // pred_check_branch
      %234 = sbr.rel (0) target = $region25
    $region24: #{tpu_custom_call.1} parent=1 // pred_region
      %s236 = ssub.s32 768, 768
      %237 = vsyncadd [#allocation4], %s236
      %s238 = sshll.u32 [#allocation7], 4
      %s239 = int_to_ptr.vmem [resolvable:$true] %s238
      %244 = dma.vmem_to_hbm [thread:$0]  %s239, 768, %s3, [#allocation4], 384, 384, 24
    $region25: #{tpu_custom_call.1} parent=1 // pred_fallthru
      _
    // Predicated region
    $region26: #{tpu_custom_call.1} parent=1 // pred_check
      _
    $region27: #{tpu_custom_call.1} parent=1 // pred_check_branch
      %246 = sbr.rel (0) target = $region29
    $region28: #{tpu_custom_call.1} parent=1 // pred_region
      %247 = dma.done [#allocation4], 768
    $region29: #{tpu_custom_call.1} parent=1 // pred_fallthru
      _
    %248 = vsyncpa [#allocation3], 1
    %249 = vsyncpa [#allocation6], 1
    %250 = vsyncpa [#allocation4], 1

</llo_original>
